<compile_context>
chip_gen: v6e
topology: v6e:2x2x1
jax: 0.10.0
libtpu: 0.0.40
codegen_flags: <defaults>
</compile_context>

<pallas_src>
import jax
import jax.numpy as jnp
import numpy as np
from jax.experimental import pallas as pl
from jax.experimental.pallas import tpu as pltpu


_LANE = 128
_ROW_ALIGN = 32            # covers f32(8)/bf16(16)/int8(32) sublane tiling
_TILE_ROWS_MAX = 8192      # folded rows per grid step (= 16384 samples, ~4 MiB f32)
_VMEM_LIMIT = 48 * 1024 * 1024


def _round_up(n, m):
    return ((n + m - 1) // m) * m


# ------------------------------ kernel ------------------------------------- #

def _make_kernel(layer_meta, num_layers):
    """Build the fused MLP kernel.

    layer_meta: tuple of (row_offset, folded_in, folded_out) static slices into
    the packed weight slab; biases live at row 8*layer of the bias slab.
    """
    def kernel(x_ref, w_ref, b_ref, out_ref):
        mxu_dt = w_ref.dtype
        # Cast to the MXU feed dtype after the tile load: HBM traffic stays in
        # the caller's dtype; bf16 feed avoids multi-pass f32 MXU emulation.
        h = x_ref[...].astype(mxu_dt)
        for li, (row_off, in2, out2) in enumerate(layer_meta):
            w = w_ref[row_off:row_off + in2, 0:out2]          # static slice (view)
            b = b_ref[8 * li:8 * li + 1, 0:out2]              # f32 bias
            h = jnp.dot(h, w, preferred_element_type=jnp.float32) + b
            if li < num_layers - 1:
                h = jnp.maximum(h, 0.0).astype(mxu_dt)
        out_ref[...] = h.astype(out_ref.dtype)
    return kernel


# ------------------------------ packing / tiling ---------------------------- #

def _pack_params(params, mxu_dtype):
    """Fold-by-2 block-diagonal packing of all weights/biases into two slabs.

    Weight slab: rows = concat of each layer's diag(W, W) block (row offsets
    aligned to 32 sublanes), lane width = max folded out-dim padded to 128.
    Bias slab: layer l's tiled bias at row 8*l (f32).
    """
    metas = []
    row = 0
    max_out2 = 0
    for (w, _b) in params:
        in_f, out_f = w.shape
        metas.append((row, 2 * in_f, 2 * out_f))
        max_out2 = max(max_out2, 2 * out_f)
        row = _round_up(row + 2 * in_f, _ROW_ALIGN)
    pack_rows = _round_up(max(row, _ROW_ALIGN), _ROW_ALIGN)
    pack_cols = _round_up(max_out2, _LANE)

    w_pack = jnp.zeros((pack_rows, pack_cols), jnp.float32)
    b_pack = jnp.zeros((8 * len(params), pack_cols), jnp.float32)
    for li, ((w, b), (row_off, in2, out2)) in enumerate(zip(params, metas)):
        in_f, out_f = w.shape
        w32 = jnp.asarray(w, jnp.float32)
        b32 = jnp.asarray(b, jnp.float32).reshape(1, -1)
        # diag(W, W): two independent samples per folded row.
        w_pack = w_pack.at[row_off:row_off + in_f, 0:out_f].set(w32)
        w_pack = w_pack.at[row_off + in_f:row_off + in2, out_f:out2].set(w32)
        b_pack = b_pack.at[8 * li:8 * li + 1, 0:out_f].set(b32)
        b_pack = b_pack.at[8 * li:8 * li + 1, out_f:out2].set(b32)
    return w_pack.astype(mxu_dtype), b_pack, tuple(metas)


def _choose_tiling(rows, tile_rows_max, min_tiles=2):
    """Pick (tile_rows, num_blocks): tile count first, then round the tile up
    to 32 rows so padding waste is < 32 rows; try to produce >= 2 grid steps so
    v7x's two TensorCores both get work."""
    if rows <= _ROW_ALIGN * min_tiles:
        # Full-extent block (exempt from the 8-row divisibility rule).
        return rows, 1
    n_tiles = max(pl.cdiv(rows, tile_rows_max), min_tiles)
    tile = _round_up(pl.cdiv(rows, n_tiles), _ROW_ALIGN)
    if tile >= rows:
        return rows, 1
    return tile, pl.cdiv(rows, tile)


# ------------------------------ wrapper ------------------------------------ #

def autoencoder_embedding_forward(x, params, *, mxu_dtype=jnp.bfloat16,
                                  out_dtype=None, tile_rows_max=_TILE_ROWS_MAX):
    """Pallas implementation of AutoEncoderEmbedding.forward (i.e. fc(x)).

    Args:
      x: [..., in_dim] activations (any leading batch dims).
      params: ((w1, b1), ..., (wN, bN)); weights stored [in, out], biases
        [1, out] or [out].  ReLU between every pair of layers, none after last.
      mxu_dtype: dtype fed to the MXU (bf16 default on all generations; f32
        accumulation and f32 biases in all cases).  Use jnp.float32 for
        bit-faithful PyTorch-style numerics.
      out_dtype: output dtype; defaults to x.dtype (PyTorch semantics).
    """
    in_dim = params[0][0].shape[0]
    out_dim = params[-1][0].shape[1]
    if out_dtype is None:
        out_dtype = x.dtype

    lead_shape = x.shape[:-1]
    x2d = x.reshape(-1, in_dim)
    B = x2d.shape[0]

    # Fold pairs of samples onto the lane axis: [B, in] -> [B/2, 2*in].
    # Zero-copy reshape for contiguous row-major x; odd B pays a 1-row pad.
    pad = (-B) % 2
    if pad:
        x2d = jnp.pad(x2d, ((0, pad), (0, 0)))
    rows = (B + pad) // 2
    x_fold = x2d.reshape(rows, 2 * in_dim)

    w_pack, b_pack, metas = _pack_params(params, mxu_dtype)
    tile_rows, num_blocks = _choose_tiling(rows, tile_rows_max)
    kernel = _make_kernel(metas, len(params))

    out_fold = pl.pallas_call(
        kernel,
        out_shape=jax.ShapeDtypeStruct((rows, 2 * out_dim), out_dtype),
        grid_spec=pltpu.PrefetchScalarGridSpec(
            num_scalar_prefetch=0,
            grid=(num_blocks,),
            in_specs=[
                pl.BlockSpec((tile_rows, 2 * in_dim), lambda i: (i, 0)),
                pl.BlockSpec(w_pack.shape, lambda i: (0, 0)),   # VMEM-resident
                pl.BlockSpec(b_pack.shape, lambda i: (0, 0)),   # VMEM-resident
            ],
            out_specs=pl.BlockSpec((tile_rows, 2 * out_dim), lambda i: (i, 0)),
        ),
        compiler_params=pltpu.CompilerParams(
            # Batch tiles are independent -> shard across v7x's 2 TensorCores.
            dimension_semantics=("parallel",),
            vmem_limit_bytes=_VMEM_LIMIT,
        ),
    )(x_fold, w_pack, b_pack)

    out2d = out_fold.reshape(rows * 2, out_dim)
    if pad:
        out2d = out2d[:B]
    return out2d.reshape(*lead_shape, out_dim)


# ------------------------------ reference / init --------------------------- #

def _init_linear(key, in_features, out_features):
    """torch.nn.Linear-style init. Weight stored [in, out]; bias [1, out]."""
    kw, kb = jax.random.split(key)
    bound = 1.0 / np.sqrt(in_features)
    w = jax.random.uniform(kw, (in_features, out_features),
                           minval=-bound, maxval=bound, dtype=jnp.float32)
    b = jax.random.uniform(kb, (1, out_features),
                           minval=-bound, maxval=bound, dtype=jnp.float32)
    return w, b


def _reference_forward(x, params):
    """Pure-JAX f32 reference matching the PyTorch Sequential semantics."""
    lead_shape = x.shape[:-1]
    h = x.reshape(-1, params[0][0].shape[0]).astype(jnp.float32)
    n = len(params)
    for li, (w, b) in enumerate(params):
        h = jnp.dot(h, w.astype(jnp.float32),
                    preferred_element_type=jnp.float32)
        h = h + b.reshape(1, -1).astype(jnp.float32)
        if li < n - 1:
            h = jnp.maximum(h, 0.0)
    return h.reshape(*lead_shape, params[-1][0].shape[1])


# ------------------------------ test --------------------------------------- #

if __name__ == "__main__":
    key = jax.random.PRNGKey(0)
    ks = jax.random.split(key, 8)

    IN_DIM, HID, BOT = 64, 32, 16
    # fc = Sequential(Linear(64,32), ReLU, Linear(32,16), ReLU,
    #                 Linear(16,32), ReLU, Linear(32,64))
    params = (
        _init_linear(ks[0], IN_DIM, HID),
        _init_linear(ks[1], HID, BOT),
        _init_linear(ks[2], BOT, HID),
        _init_linear(ks[3], HID, IN_DIM),
    )

    # --- f32 MXU path, small even batch (single full-extent block) ---
    x = jax.random.normal(ks[4], (8, IN_DIM), dtype=jnp.float32)
    out = jax.block_until_ready(
        autoencoder_embedding_forward(x, params, mxu_dtype=jnp.float32))
    ref = _reference_forward(x, params)
    assert out.dtype == x.dtype
    np.testing.assert_allclose(np.asarray(out), np.asarray(ref),
                               rtol=1e-4, atol=1e-4)

    # --- odd batch (exercises the 1-row pad + unfold slice) ---
    x2 = jax.random.normal(ks[5], (7, IN_DIM), dtype=jnp.float32)
    out2 = jax.block_until_ready(
        autoencoder_embedding_forward(x2, params, mxu_dtype=jnp.float32))
    ref2 = _reference_forward(x2, params)
    np.testing.assert_allclose(np.asarray(out2), np.asarray(ref2),
                               rtol=1e-4, atol=1e-4)

    # --- multi-block grid with a ragged last block (OOB masking path) ---
    # B=200 -> 100 folded rows -> tile 64, grid=(2,), last block 36 valid rows.
    x3 = jax.random.normal(ks[6], (200, IN_DIM), dtype=jnp.float32)
    out3 = jax.block_until_ready(
        autoencoder_embedding_forward(x3, params, mxu_dtype=jnp.float32))
    ref3 = _reference_forward(x3, params)
    np.testing.assert_allclose(np.asarray(out3), np.asarray(ref3),
                               rtol=1e-4, atol=1e-4)

    # --- default bf16 MXU feed (HBM I/O stays f32, f32 accumulation) ---
    out4 = jax.block_until_ready(autoencoder_embedding_forward(x3, params))
    assert out4.dtype == x3.dtype
    np.testing.assert_allclose(np.asarray(out4), np.asarray(ref3),
                               rtol=5e-2, atol=5e-2)

    print("KERNEL_OK")
</pallas_src>

<mosaic_0001>
module attributes {stable_mosaic.version = 11 : i64} {
  func.func @kernel(%arg0: i32, %arg1: memref<4x128xf32, #tpu.memory_space<vmem>>, %arg2: memref<288x128xf32, #tpu.memory_space<vmem>>, %arg3: memref<32x128xf32, #tpu.memory_space<vmem>>, %arg4: memref<4x128xf32, #tpu.memory_space<vmem>>) attributes {dimension_semantics = [#tpu.dimension_semantics<parallel>], iteration_bounds = array<i64: 1>, scalar_prefetch = 0 : i64, scratch_operands = 0 : i64, tpu.core_type = #tpu.core_type<tc>, window_params = [{transform_indices = @transform_0, window_bounds = array<i64: 4, 128>}, {pipeline_mode = #tpu.pipeline_mode<synchronous>, transform_indices = @transform_1, window_bounds = array<i64: 288, 128>}, {pipeline_mode = #tpu.pipeline_mode<synchronous>, transform_indices = @transform_2, window_bounds = array<i64: 32, 128>}, {transform_indices = @transform_3, window_bounds = array<i64: 4, 128>}]} {
    %c0 = arith.constant 0 : index
    %c0_0 = arith.constant 0 : index
    %0 = vector.load %arg1[%c0, %c0_0] : memref<4x128xf32, #tpu.memory_space<vmem>>, vector<4x128xf32>
    %c0_1 = arith.constant 0 : index
    %c0_2 = arith.constant 0 : index
    %1 = vector.load %arg2[%c0_1, %c0_2] : memref<288x128xf32, #tpu.memory_space<vmem>>, vector<128x64xf32>
    %c0_3 = arith.constant 0 : index
    %c0_4 = arith.constant 0 : index
    %2 = vector.load %arg3[%c0_3, %c0_4] : memref<32x128xf32, #tpu.memory_space<vmem>>, vector<1x64xf32>
    %cst = arith.constant dense<0.000000e+00> : vector<4x64xf32>
    %3 = tpu.matmul %0, %1, %cst {dimension_numbers = #tpu.dot_dimension_numbers<[1], [0], [0], [1], [0, 0, 1, 1], [], []>} : vector<4x128xf32>, vector<128x64xf32>, vector<4x64xf32> -> vector<4x64xf32>
    %4 = vector.broadcast %2 : vector<1x64xf32> to vector<4x64xf32>
    %5 = arith.addf %3, %4 : vector<4x64xf32>
    %cst_5 = arith.constant 0.000000e+00 : f32
    %6 = vector.broadcast %cst_5 : f32 to vector<4x64xf32>
    %7 = arith.maximumf %5, %6 : vector<4x64xf32>
    %c128 = arith.constant 128 : index
    %c0_6 = arith.constant 0 : index
    %8 = vector.load %arg2[%c128, %c0_6] : memref<288x128xf32, #tpu.memory_space<vmem>>, vector<64x32xf32>
    %c8 = arith.constant 8 : index
    %c0_7 = arith.constant 0 : index
    %9 = vector.load %arg3[%c8, %c0_7] : memref<32x128xf32, #tpu.memory_space<vmem>>, vector<1x32xf32>
    %cst_8 = arith.constant dense<0.000000e+00> : vector<4x32xf32>
    %10 = tpu.matmul %7, %8, %cst_8 {dimension_numbers = #tpu.dot_dimension_numbers<[1], [0], [0], [1], [0, 0, 1, 1], [], []>} : vector<4x64xf32>, vector<64x32xf32>, vector<4x32xf32> -> vector<4x32xf32>
    %11 = vector.broadcast %9 : vector<1x32xf32> to vector<4x32xf32>
    %12 = arith.addf %10, %11 : vector<4x32xf32>
    %cst_9 = arith.constant 0.000000e+00 : f32
    %13 = vector.broadcast %cst_9 : f32 to vector<4x32xf32>
    %14 = arith.maximumf %12, %13 : vector<4x32xf32>
    %c192 = arith.constant 192 : index
    %c0_10 = arith.constant 0 : index
    %15 = vector.load %arg2[%c192, %c0_10] : memref<288x128xf32, #tpu.memory_space<vmem>>, vector<32x64xf32>
    %c16 = arith.constant 16 : index
    %c0_11 = arith.constant 0 : index
    %16 = vector.load %arg3[%c16, %c0_11] : memref<32x128xf32, #tpu.memory_space<vmem>>, vector<1x64xf32>
    %cst_12 = arith.constant dense<0.000000e+00> : vector<4x64xf32>
    %17 = tpu.matmul %14, %15, %cst_12 {dimension_numbers = #tpu.dot_dimension_numbers<[1], [0], [0], [1], [0, 0, 1, 1], [], []>} : vector<4x32xf32>, vector<32x64xf32>, vector<4x64xf32> -> vector<4x64xf32>
    %18 = vector.broadcast %16 : vector<1x64xf32> to vector<4x64xf32>
    %19 = arith.addf %17, %18 : vector<4x64xf32>
    %cst_13 = arith.constant 0.000000e+00 : f32
    %20 = vector.broadcast %cst_13 : f32 to vector<4x64xf32>
    %21 = arith.maximumf %19, %20 : vector<4x64xf32>
    %c224 = arith.constant 224 : index
    %c0_14 = arith.constant 0 : index
    %22 = vector.load %arg2[%c224, %c0_14] : memref<288x128xf32, #tpu.memory_space<vmem>>, vector<64x128xf32>
    %c24 = arith.constant 24 : index
    %c0_15 = arith.constant 0 : index
    %23 = vector.load %arg3[%c24, %c0_15] : memref<32x128xf32, #tpu.memory_space<vmem>>, vector<1x128xf32>
    %cst_16 = arith.constant dense<0.000000e+00> : vector<4x128xf32>
    %24 = tpu.matmul %21, %22, %cst_16 {dimension_numbers = #tpu.dot_dimension_numbers<[1], [0], [0], [1], [0, 0, 1, 1], [], []>} : vector<4x64xf32>, vector<64x128xf32>, vector<4x128xf32> -> vector<4x128xf32>
    %25 = vector.broadcast %23 : vector<1x128xf32> to vector<4x128xf32>
    %26 = arith.addf %24, %25 : vector<4x128xf32>
    %c0_17 = arith.constant 0 : index
    %c0_18 = arith.constant 0 : index
    %27 = vector.load %arg4[%c0_17, %c0_18] : memref<4x128xf32, #tpu.memory_space<vmem>>, vector<4x128xf32>
    tpu.vector_store %arg4[%c0_17, %c0_18], %26 {strides = array<i32>} : memref<4x128xf32, #tpu.memory_space<vmem>>, vector<4x128xf32>,
    return
  }
  func.func @transform_0(%arg0: i32) -> (i32, i32) {
    %c0_i32 = arith.constant 0 : i32
    %c0_i32_0 = arith.constant 0 : i32
    return %arg0, %c0_i32 : i32, i32
  }
  func.func @transform_1(%arg0: i32) -> (i32, i32) {
    %c0_i32 = arith.constant 0 : i32
    %c0_i32_0 = arith.constant 0 : i32
    %c0_i32_1 = arith.constant 0 : i32
    return %c0_i32, %c0_i32_0 : i32, i32
  }
  func.func @transform_2(%arg0: i32) -> (i32, i32) {
    %c0_i32 = arith.constant 0 : i32
    %c0_i32_0 = arith.constant 0 : i32
    %c0_i32_1 = arith.constant 0 : i32
    return %c0_i32, %c0_i32_0 : i32, i32
  }
  func.func @transform_3(%arg0: i32) -> (i32, i32) {
    %c0_i32 = arith.constant 0 : i32
    %c0_i32_0 = arith.constant 0 : i32
    return %arg0, %c0_i32 : i32, i32
  }
}

</mosaic_0001>

<llo_original>
// kernel: tpu_custom_call.1
$region0: #{tpu_custom_call.1}
  #allocation0 [shape = 'u32[]', space=smem, size = 0x4, offset = 0x4, fixed_abs, tag = 'smem constant byte address 0x4 - core index']
  #allocation1 [shape = 'u32[144,128]{1,0:T(1,128)}', space=vmem, size = 0x12000, scoped, tag = 'internal scratch']
  %s0 = inlined_call_operand.hbm [shape: f32[4,128], index: 0, kind: input, shape index: {}]
  %s1 = inlined_call_operand.hbm [shape: f32[288,128], index: 1, kind: input, shape index: {}]
  %s2 = inlined_call_operand.hbm [shape: f32[32,128], index: 2, kind: input, shape index: {}]
  %s3 = inlined_call_operand.hbm [shape: f32[4,128], index: 3, kind: output, shape index: {}]
  %s4 = sld [smem:[#allocation0]]
  $region34: #{tpu_custom_call.1} parent=0
    _
  %s6 = ssub.s32 1, %s4
  %s7 = scalar_select 0, %s6, %s4
  $region1: #{tpu_custom_call.1} parent=0
    #allocation2 [shape = 'u8[2048]{0}', space=vmem, size = 0x800, scoped, tag = 'input window, operand 0, single buffered']
    #allocation3 [shape = 's32[1]{0}', space=sflag, size = 0x4, scoped, tag = 'scoped memory for tpu_custom_call.1']
    #allocation4 [shape = 's32[1]{0}', space=sflag, size = 0x4, scoped, tag = 'scoped memory for tpu_custom_call.1']
    #allocation5 [shape = 'u8[147456]{0}', space=vmem, size = 0x24000, scoped, tag = 'input window, operand 1, single buffered']
    #allocation6 [shape = 's32[1]{0}', space=sflag, size = 0x4, scoped, tag = 'scoped memory for tpu_custom_call.1']
    #allocation7 [shape = 'u8[16384]{0}', space=vmem, size = 0x4000, scoped, tag = 'input window, operand 2, single buffered']
    #allocation8 [shape = 'u8[2048]{0}', space=vmem, size = 0x800, scoped, tag = 'output window, operand 0, single buffered']
    %8 = vsyncpa [#allocation3], 0
    %9 = vsyncpa [#allocation6], 0
    %10 = vsyncpa [#allocation4], 0
    // Predicated region
    $region2: #{tpu_custom_call.1} parent=1 // pred_check
      _
    $region3: #{tpu_custom_call.1} parent=1 // pred_check_branch
      %12 = sbr.rel (0) target = $region5
    $region4: #{tpu_custom_call.1} parent=1 // pred_region
      %s14 = ssub.s32 64, 64
      %15 = vsyncadd [#allocation3], %s14
      %s17 = sshll.u32 [#allocation2], 4
      %s18 = int_to_ptr.vmem [resolvable:$true] %s17
      %20 = dma.hbm_to_vmem [thread:$0]  %s0, 64, %s18, [#allocation3]
    $region5: #{tpu_custom_call.1} parent=1 // pred_fallthru
      _
    // Predicated region
    $region6: #{tpu_custom_call.1} parent=1 // pred_check
      _
    $region7: #{tpu_custom_call.1} parent=1 // pred_check_branch
      %22 = sbr.rel (0) target = $region9
    $region8: #{tpu_custom_call.1} parent=1 // pred_region
      %s24 = ssub.s32 4608, 4608
      %25 = vsyncadd [#allocation6], %s24
      %s26 = sshll.u32 [#allocation5], 4
      %s27 = int_to_ptr.vmem [resolvable:$true] %s26
      %32 = dma.hbm_to_vmem [thread:$0]  %s1, 4608, %s27, [#allocation6], 128, 128, 8
    $region9: #{tpu_custom_call.1} parent=1 // pred_fallthru
      _
    // Predicated region
    $region10: #{tpu_custom_call.1} parent=1 // pred_check
      _
    $region11: #{tpu_custom_call.1} parent=1 // pred_check_branch
      %34 = sbr.rel (0) target = $region13
    $region12: #{tpu_custom_call.1} parent=1 // pred_region
      %s36 = ssub.s32 512, 512
      %37 = vsyncadd [#allocation6], %s36
      %s38 = sshll.u32 [#allocation7], 4
      %s39 = int_to_ptr.vmem [resolvable:$true] %s38
      %44 = dma.hbm_to_vmem [thread:$0]  %s2, 512, %s39, [#allocation6], 128, 128, 8
    $region13: #{tpu_custom_call.1} parent=1 // pred_fallthru
      _
    // Predicated region
    $region14: #{tpu_custom_call.1} parent=1 // pred_check
      _
    $region15: #{tpu_custom_call.1} parent=1 // pred_check_branch
      %46 = sbr.rel (0) target = $region17
    $region16: #{tpu_custom_call.1} parent=1 // pred_region
      %47 = dma.done [#allocation3], 64
    $region17: #{tpu_custom_call.1} parent=1 // pred_fallthru
      _
    // Predicated region
    $region18: #{tpu_custom_call.1} parent=1 // pred_check
      _
    $region19: #{tpu_custom_call.1} parent=1 // pred_check_branch
      %49 = sbr.rel (0) target = $region21
    $region20: #{tpu_custom_call.1} parent=1 // pred_region
      %50 = dma.done [#allocation6], 4608
    $region21: #{tpu_custom_call.1} parent=1 // pred_fallthru
      _
    // Predicated region
    $region22: #{tpu_custom_call.1} parent=1 // pred_check
      _
    $region23: #{tpu_custom_call.1} parent=1 // pred_check_branch
      %52 = sbr.rel (0) target = $region25
    $region24: #{tpu_custom_call.1} parent=1 // pred_region
      %53 = dma.done [#allocation6], 512
    $region25: #{tpu_custom_call.1} parent=1 // pred_fallthru
      _
    %v54 = vld [vmem:[#allocation2] sm:$0xf]
    %v55 = vld [vmem:[#allocation5] sm:$0xff]
    %v56 = vld [vmem:[#allocation5 + $0x8] sm:$0xff]
    %v57 = vld [vmem:[#allocation5 + $0x10] sm:$0xff]
    %v58 = vld [vmem:[#allocation5 + $0x18] sm:$0xff]
    %v59 = vld [vmem:[#allocation5 + $0x20] sm:$0xff]
    %v60 = vld [vmem:[#allocation5 + $0x28] sm:$0xff]
    %v61 = vld [vmem:[#allocation5 + $0x30] sm:$0xff]
    %v62 = vld [vmem:[#allocation5 + $0x38] sm:$0xff]
    %v63 = vld [vmem:[#allocation5 + $0x40] sm:$0xff]
    %v64 = vld [vmem:[#allocation5 + $0x48] sm:$0xff]
    %v65 = vld [vmem:[#allocation5 + $0x50] sm:$0xff]
    %v66 = vld [vmem:[#allocation5 + $0x58] sm:$0xff]
    %v67 = vld [vmem:[#allocation5 + $0x60] sm:$0xff]
    %v68 = vld [vmem:[#allocation5 + $0x68] sm:$0xff]
    %v69 = vld [vmem:[#allocation5 + $0x70] sm:$0xff]
    %v70 = vld [vmem:[#allocation5 + $0x78] sm:$0xff]
    %v71 = vld [vmem:[#allocation7] sm:$0x1]
    %v72 = vlaneseq
    %v73 = vshrl.u32 %v72, 7
    %v74 = vsub.s32 0, %v73
    %v75 = vrot.slane %v71, %v74
    %76 = vmatprep.subr.mxu0 0.0
    %77 = vmatpush1.msra.mxu0 %v70
    %78 = vmatprep.subr.mxu0 0.0
    %79 = vmatpush1.msra.mxu0 %v69
    %80 = vmatprep.subr.mxu0 0.0
    %81 = vmatpush1.msra.mxu0 %v68
    %82 = vmatprep.subr.mxu0 0.0
    %83 = vmatpush1.msra.mxu0 %v67
    %84 = vmatprep.subr.mxu0 0.0
    %85 = vmatpush1.msra.mxu0 %v66
    %86 = vmatprep.subr.mxu0 0.0
    %87 = vmatpush1.msra.mxu0 %v65
    %88 = vmatprep.subr.mxu0 0.0
    %89 = vmatpush1.msra.mxu0 %v64
    %90 = vmatprep.subr.mxu0 0.0
    %91 = vmatpush1.msra.mxu0 %v63
    %92 = vmatprep.subr.mxu0 0.0
    %93 = vmatpush1.msra.mxu0 %v62
    %94 = vmatprep.subr.mxu0 0.0
    %95 = vmatpush1.msra.mxu0 %v61
    %96 = vmatprep.subr.mxu0 0.0
    %97 = vmatpush1.msra.mxu0 %v60
    %98 = vmatprep.subr.mxu0 0.0
    %99 = vmatpush1.msra.mxu0 %v59
    %100 = vmatprep.subr.mxu0 0.0
    %101 = vmatpush1.msra.mxu0 %v58
    %102 = vmatprep.subr.mxu0 0.0
    %103 = vmatpush1.msra.mxu0 %v57
    %104 = vmatprep.subr.mxu0 0.0
    %105 = vmatpush1.msra.mxu0 %v56
    %106 = vmatprep.subr.mxu0 0.0
    %107 = vmatpush1.msra.mxu0 %v55
    %108 = vmatprep.subr.mxu0 0.0
    %109 = vmatpush2.msra.mxu0 0.0
    %110 = vmatprep.subr.mxu0 0.0
    %111 = vmatpush2.msra.mxu0 0.0
    %112 = vmatprep.subr.mxu0 0.0
    %113 = vmatpush2.msra.mxu0 0.0
    %114 = vmatprep.subr.mxu0 0.0
    %115 = vmatpush2.msra.mxu0 0.0
    %116 = vmatprep.subr.mxu0 0.0
    %117 = vmatpush2.msra.mxu0 0.0
    %118 = vmatprep.subr.mxu0 0.0
    %119 = vmatpush2.msra.mxu0 0.0
    %120 = vmatprep.subr.mxu0 0.0
    %121 = vmatpush2.msra.mxu0 0.0
    %122 = vmatprep.subr.mxu0 0.0
    %123 = vmatpush2.msra.mxu0 0.0
    %124 = vmatprep.subr.mxu0 0.0
    %125 = vmatpush2.msra.mxu0 0.0
    %126 = vmatprep.subr.mxu0 0.0
    %127 = vmatpush2.msra.mxu0 0.0
    %128 = vmatprep.subr.mxu0 0.0
    %129 = vmatpush2.msra.mxu0 0.0
    %130 = vmatprep.subr.mxu0 0.0
    %131 = vmatpush2.msra.mxu0 0.0
    %132 = vmatprep.subr.mxu0 0.0
    %133 = vmatpush2.msra.mxu0 0.0
    %134 = vmatprep.subr.mxu0 0.0
    %135 = vmatpush2.msra.mxu0 0.0
    %136 = vmatprep.subr.mxu0 0.0
    %137 = vmatpush2.msra.mxu0 0.0
    %138 = vmatprep.subr.mxu0 0.0
    %139 = vmatpush2.msra.mxu0 0.0
    %140 = vmatprep.mubr.f32.mxu0 0.0
    %141 = vmatmul.mubr.f32.gmra.mxu0 %v54
    %v142 = vpop.f32.mrf.mxu0
    %v143 = vadd.f32 %v75, %v142
    %v144 = vpop.f32.mrf.mxu0
    %145 = vdwg.mxu0
    %v146 = vmax.f32 %v143, 0.0
    %v147 = vld [vmem:[#allocation5 + $0x80] sm:$0xff]
    %v148 = vld [vmem:[#allocation5 + $0x88] sm:$0xff]
    %v149 = vld [vmem:[#allocation5 + $0x90] sm:$0xff]
    %v150 = vld [vmem:[#allocation5 + $0x98] sm:$0xff]
    %v151 = vld [vmem:[#allocation5 + $0xa0] sm:$0xff]
    %v152 = vld [vmem:[#allocation5 + $0xa8] sm:$0xff]
    %v153 = vld [vmem:[#allocation5 + $0xb0] sm:$0xff]
    %v154 = vld [vmem:[#allocation5 + $0xb8] sm:$0xff]
    %v155 = vld [vmem:[#allocation7 + $0x8] sm:$0x1]
    %v156 = vlaneseq
    %v157 = vshrl.u32 %v156, 7
    %v158 = vsub.s32 0, %v157
    %v159 = vrot.slane %v155, %v158
    %vm160 = vcmask 523264
    %v162 = vsel %vm160, %v146, 0
    %164 = vmatprep.subr.mxu0 0.0
    %165 = vmatpush1.msra.mxu0 0.0
    %166 = vmatprep.subr.mxu0 0.0
    %167 = vmatpush1.msra.mxu0 0.0
    %168 = vmatprep.subr.mxu0 0.0
    %169 = vmatpush1.msra.mxu0 0.0
    %170 = vmatprep.subr.mxu0 0.0
    %171 = vmatpush1.msra.mxu0 0.0
    %172 = vmatprep.subr.mxu0 0.0
    %173 = vmatpush1.msra.mxu0 0.0
    %174 = vmatprep.subr.mxu0 0.0
    %175 = vmatpush1.msra.mxu0 0.0
    %176 = vmatprep.subr.mxu0 0.0
    %177 = vmatpush1.msra.mxu0 0.0
    %178 = vmatprep.subr.mxu0 0.0
    %179 = vmatpush1.msra.mxu0 0.0
    %180 = vmatprep.subr.mxu0 0.0
    %181 = vmatpush1.msra.mxu0 %v154
    %182 = vmatprep.subr.mxu0 0.0
    %183 = vmatpush1.msra.mxu0 %v153
    %184 = vmatprep.subr.mxu0 0.0
    %185 = vmatpush1.msra.mxu0 %v152
    %186 = vmatprep.subr.mxu0 0.0
    %187 = vmatpush1.msra.mxu0 %v151
    %188 = vmatprep.subr.mxu0 0.0
    %189 = vmatpush1.msra.mxu0 %v150
    %190 = vmatprep.subr.mxu0 0.0
    %191 = vmatpush1.msra.mxu0 %v149
    %192 = vmatprep.subr.mxu0 0.0
    %193 = vmatpush1.msra.mxu0 %v148
    %194 = vmatprep.subr.mxu0 0.0
    %195 = vmatpush1.msra.mxu0 %v147
    %196 = vmatprep.subr.mxu0 0.0
    %197 = vmatpush2.msra.mxu0 0.0
    %198 = vmatprep.subr.mxu0 0.0
    %199 = vmatpush2.msra.mxu0 0.0
    %200 = vmatprep.subr.mxu0 0.0
    %201 = vmatpush2.msra.mxu0 0.0
    %202 = vmatprep.subr.mxu0 0.0
    %203 = vmatpush2.msra.mxu0 0.0
    %204 = vmatprep.subr.mxu0 0.0
    %205 = vmatpush2.msra.mxu0 0.0
    %206 = vmatprep.subr.mxu0 0.0
    %207 = vmatpush2.msra.mxu0 0.0
    %208 = vmatprep.subr.mxu0 0.0
    %209 = vmatpush2.msra.mxu0 0.0
    %210 = vmatprep.subr.mxu0 0.0
    %211 = vmatpush2.msra.mxu0 0.0
    %212 = vmatprep.subr.mxu0 0.0
    %213 = vmatpush2.msra.mxu0 0.0
    %214 = vmatprep.subr.mxu0 0.0
    %215 = vmatpush2.msra.mxu0 0.0
    %216 = vmatprep.subr.mxu0 0.0
    %217 = vmatpush2.msra.mxu0 0.0
    %218 = vmatprep.subr.mxu0 0.0
    %219 = vmatpush2.msra.mxu0 0.0
    %220 = vmatprep.subr.mxu0 0.0
    %221 = vmatpush2.msra.mxu0 0.0
    %222 = vmatprep.subr.mxu0 0.0
    %223 = vmatpush2.msra.mxu0 0.0
    %224 = vmatprep.subr.mxu0 0.0
    %225 = vmatpush2.msra.mxu0 0.0
    %226 = vmatprep.subr.mxu0 0.0
    %227 = vmatpush2.msra.mxu0 0.0
    %228 = vmatprep.mubr.f32.mxu0 0.0
    %229 = vmatmul.mubr.f32.gmra.mxu0 %v162
    %v230 = vpop.f32.mrf.mxu0
    %v231 = vadd.f32 %v159, %v230
    %v232 = vpop.f32.mrf.mxu0
    %233 = vdwg.mxu0
    %v234 = vmax.f32 %v231, 0.0
    %v235 = vld [vmem:[#allocation5 + $0xc0] sm:$0xff]
    %v236 = vld [vmem:[#allocation5 + $0xc8] sm:$0xff]
    %v237 = vld [vmem:[#allocation5 + $0xd0] sm:$0xff]
    %v238 = vld [vmem:[#allocation5 + $0xd8] sm:$0xff]
    %v239 = vld [vmem:[#allocation7 + $0x10] sm:$0x1]
    %v240 = vlaneseq
    %v241 = vshrl.u32 %v240, 7
    %v242 = vsub.s32 0, %v241
    %v243 = vrot.slane %v239, %v242
    %vm244 = vcmask 261120
    %v246 = vsel %vm244, %v234, 0
    %248 = vmatprep.subr.mxu0 0.0
    %249 = vmatpush1.msra.mxu0 0.0
    %250 = vmatprep.subr.mxu0 0.0
    %251 = vmatpush1.msra.mxu0 0.0
    %252 = vmatprep.subr.mxu0 0.0
    %253 = vmatpush1.msra.mxu0 0.0
    %254 = vmatprep.subr.mxu0 0.0
    %255 = vmatpush1.msra.mxu0 0.0
    %256 = vmatprep.subr.mxu0 0.0
    %257 = vmatpush1.msra.mxu0 0.0
    %258 = vmatprep.subr.mxu0 0.0
    %259 = vmatpush1.msra.mxu0 0.0
    %260 = vmatprep.subr.mxu0 0.0
    %261 = vmatpush1.msra.mxu0 0.0
    %262 = vmatprep.subr.mxu0 0.0
    %263 = vmatpush1.msra.mxu0 0.0
    %264 = vmatprep.subr.mxu0 0.0
    %265 = vmatpush1.msra.mxu0 0.0
    %266 = vmatprep.subr.mxu0 0.0
    %267 = vmatpush1.msra.mxu0 0.0
    %268 = vmatprep.subr.mxu0 0.0
    %269 = vmatpush1.msra.mxu0 0.0
    %270 = vmatprep.subr.mxu0 0.0
    %271 = vmatpush1.msra.mxu0 0.0
    %272 = vmatprep.subr.mxu0 0.0
    %273 = vmatpush1.msra.mxu0 %v238
    %274 = vmatprep.subr.mxu0 0.0
    %275 = vmatpush1.msra.mxu0 %v237
    %276 = vmatprep.subr.mxu0 0.0
    %277 = vmatpush1.msra.mxu0 %v236
    %278 = vmatprep.subr.mxu0 0.0
    %279 = vmatpush1.msra.mxu0 %v235
    %280 = vmatprep.subr.mxu0 0.0
    %281 = vmatpush2.msra.mxu0 0.0
    %282 = vmatprep.subr.mxu0 0.0
    %283 = vmatpush2.msra.mxu0 0.0
    %284 = vmatprep.subr.mxu0 0.0
    %285 = vmatpush2.msra.mxu0 0.0
    %286 = vmatprep.subr.mxu0 0.0
    %287 = vmatpush2.msra.mxu0 0.0
    %288 = vmatprep.subr.mxu0 0.0
    %289 = vmatpush2.msra.mxu0 0.0
    %290 = vmatprep.subr.mxu0 0.0
    %291 = vmatpush2.msra.mxu0 0.0
    %292 = vmatprep.subr.mxu0 0.0
    %293 = vmatpush2.msra.mxu0 0.0
    %294 = vmatprep.subr.mxu0 0.0
    %295 = vmatpush2.msra.mxu0 0.0
    %296 = vmatprep.subr.mxu0 0.0
    %297 = vmatpush2.msra.mxu0 0.0
    %298 = vmatprep.subr.mxu0 0.0
    %299 = vmatpush2.msra.mxu0 0.0
    %300 = vmatprep.subr.mxu0 0.0
    %301 = vmatpush2.msra.mxu0 0.0
    %302 = vmatprep.subr.mxu0 0.0
    %303 = vmatpush2.msra.mxu0 0.0
    %304 = vmatprep.subr.mxu0 0.0
    %305 = vmatpush2.msra.mxu0 0.0
    %306 = vmatprep.subr.mxu0 0.0
    %307 = vmatpush2.msra.mxu0 0.0
    %308 = vmatprep.subr.mxu0 0.0
    %309 = vmatpush2.msra.mxu0 0.0
    %310 = vmatprep.subr.mxu0 0.0
    %311 = vmatpush2.msra.mxu0 0.0
    %312 = vmatprep.mubr.f32.mxu0 0.0
    %313 = vmatmul.mubr.f32.gmra.mxu0 %v246
    %v314 = vpop.f32.mrf.mxu0
    %v315 = vadd.f32 %v243, %v314
    %v316 = vpop.f32.mrf.mxu0
    %317 = vdwg.mxu0
    %v318 = vmax.f32 %v315, 0.0
    %v319 = vld [vmem:[#allocation5 + $0xe0] sm:$0xff]
    %v320 = vld [vmem:[#allocation5 + $0xe8] sm:$0xff]
    %v321 = vld [vmem:[#allocation5 + $0xf0] sm:$0xff]
    %v322 = vld [vmem:[#allocation5 + $0xf8] sm:$0xff]
    %v323 = vld [vmem:[#allocation5 + $0x100] sm:$0xff]
    %v324 = vld [vmem:[#allocation5 + $0x108] sm:$0xff]
    %v325 = vld [vmem:[#allocation5 + $0x110] sm:$0xff]
    %v326 = vld [vmem:[#allocation5 + $0x118] sm:$0xff]
    %v327 = vld [vmem:[#allocation7 + $0x18] sm:$0x1]
    %v328 = vlaneseq
    %v329 = vshrl.u32 %v328, 7
    %v330 = vsub.s32 0, %v329
    %v331 = vrot.slane %v327, %v330
    %v333 = vsel %vm160, %v318, 0
    %335 = vmatprep.subr.mxu0 0.0
    %336 = vmatpush1.msra.mxu0 0.0
    %337 = vmatprep.subr.mxu0 0.0
    %338 = vmatpush1.msra.mxu0 0.0
    %339 = vmatprep.subr.mxu0 0.0
    %340 = vmatpush1.msra.mxu0 0.0
    %341 = vmatprep.subr.mxu0 0.0
    %342 = vmatpush1.msra.mxu0 0.0
    %343 = vmatprep.subr.mxu0 0.0
    %344 = vmatpush1.msra.mxu0 0.0
    %345 = vmatprep.subr.mxu0 0.0
    %346 = vmatpush1.msra.mxu0 0.0
    %347 = vmatprep.subr.mxu0 0.0
    %348 = vmatpush1.msra.mxu0 0.0
    %349 = vmatprep.subr.mxu0 0.0
    %350 = vmatpush1.msra.mxu0 0.0
    %351 = vmatprep.subr.mxu0 0.0
    %352 = vmatpush1.msra.mxu0 %v326
    %353 = vmatprep.subr.mxu0 0.0
    %354 = vmatpush1.msra.mxu0 %v325
    %355 = vmatprep.subr.mxu0 0.0
    %356 = vmatpush1.msra.mxu0 %v324
    %357 = vmatprep.subr.mxu0 0.0
    %358 = vmatpush1.msra.mxu0 %v323
    %359 = vmatprep.subr.mxu0 0.0
    %360 = vmatpush1.msra.mxu0 %v322
    %361 = vmatprep.subr.mxu0 0.0
    %362 = vmatpush1.msra.mxu0 %v321
    %363 = vmatprep.subr.mxu0 0.0
    %364 = vmatpush1.msra.mxu0 %v320
    %365 = vmatprep.subr.mxu0 0.0
    %366 = vmatpush1.msra.mxu0 %v319
    %367 = vmatprep.subr.mxu0 0.0
    %368 = vmatpush2.msra.mxu0 0.0
    %369 = vmatprep.subr.mxu0 0.0
    %370 = vmatpush2.msra.mxu0 0.0
    %371 = vmatprep.subr.mxu0 0.0
    %372 = vmatpush2.msra.mxu0 0.0
    %373 = vmatprep.subr.mxu0 0.0
    %374 = vmatpush2.msra.mxu0 0.0
    %375 = vmatprep.subr.mxu0 0.0
    %376 = vmatpush2.msra.mxu0 0.0
    %377 = vmatprep.subr.mxu0 0.0
    %378 = vmatpush2.msra.mxu0 0.0
    %379 = vmatprep.subr.mxu0 0.0
    %380 = vmatpush2.msra.mxu0 0.0
    %381 = vmatprep.subr.mxu0 0.0
    %382 = vmatpush2.msra.mxu0 0.0
    %383 = vmatprep.subr.mxu0 0.0
    %384 = vmatpush2.msra.mxu0 0.0
    %385 = vmatprep.subr.mxu0 0.0
    %386 = vmatpush2.msra.mxu0 0.0
    %387 = vmatprep.subr.mxu0 0.0
    %388 = vmatpush2.msra.mxu0 0.0
    %389 = vmatprep.subr.mxu0 0.0
    %390 = vmatpush2.msra.mxu0 0.0
    %391 = vmatprep.subr.mxu0 0.0
    %392 = vmatpush2.msra.mxu0 0.0
    %393 = vmatprep.subr.mxu0 0.0
    %394 = vmatpush2.msra.mxu0 0.0
    %395 = vmatprep.subr.mxu0 0.0
    %396 = vmatpush2.msra.mxu0 0.0
    %397 = vmatprep.subr.mxu0 0.0
    %398 = vmatpush2.msra.mxu0 0.0
    %399 = vmatprep.mubr.f32.mxu0 0.0
    %400 = vmatmul.mubr.f32.gmra.mxu0 %v333
    %v401 = vpop.f32.mrf.mxu0
    %v402 = vadd.f32 %v331, %v401
    %v403 = vpop.f32.mrf.mxu0
    %404 = vdwg.mxu0
    %405 = vst [vmem:[#allocation8] sm:$0xf] %v402
    // Predicated region
    $region26: #{tpu_custom_call.1} parent=1 // pred_check
      _
    $region27: #{tpu_custom_call.1} parent=1 // pred_check_branch
      %407 = sbr.rel (0) target = $region29
    $region28: #{tpu_custom_call.1} parent=1 // pred_region
      %s409 = ssub.s32 64, 64
      %410 = vsyncadd [#allocation4], %s409
      %s412 = sshll.u32 [#allocation8], 4
      %s413 = int_to_ptr.vmem [resolvable:$true] %s412
      %415 = dma.vmem_to_hbm [thread:$0]  %s413, 64, %s3, [#allocation4]
    $region29: #{tpu_custom_call.1} parent=1 // pred_fallthru
      _
    // Predicated region
    $region30: #{tpu_custom_call.1} parent=1 // pred_check
      _
    $region31: #{tpu_custom_call.1} parent=1 // pred_check_branch
      %417 = sbr.rel (0) target = $region33
    $region32: #{tpu_custom_call.1} parent=1 // pred_region
      %418 = dma.done [#allocation4], 64
    $region33: #{tpu_custom_call.1} parent=1 // pred_fallthru
      _
    %419 = vsyncpa [#allocation3], 1
    %420 = vsyncpa [#allocation6], 1
    %421 = vsyncpa [#allocation4], 1

</llo_original>
